<compile_context>
chip_gen: v5e
topology: v5e:2x2
jax: 0.10.0
libtpu: 0.0.40
codegen_flags: <defaults>
</compile_context>

<pallas_src>
import math
import functools

import jax
import jax.numpy as jnp
from jax.experimental import pallas as pl
from jax.experimental.pallas import tpu as pltpu


def _round_up(x, m):
    return ((x + m - 1) // m) * m


def _fused_gcn_kernel(a_ref, h0_ref, w_ref, b_ref, o_ref, h_scr):
    """One grid step == one GCN layer.

    a_ref  : [NP, NP]  normalized adjacency A_hat (resident across layers)
    h0_ref : [NP, FP]  padded input features (resident; read only at layer 0)
    w_ref  : [FP, FP]  this layer's padded weight (pipelined per layer)
    b_ref  : [1,  FP]  this layer's padded bias
    o_ref  : [NP, FP]  output (written on the last layer only)
    h_scr  : [NP, FP]  VMEM scratch carrying activations between layers
    """
    layer = pl.program_id(0)
    n_layers = pl.num_programs(0)

    @pl.when(layer == 0)
    def _():
        h_scr[...] = h0_ref[...]

    # Feature transform (MXU): [NP, FP] @ [FP, FP]
    t = jnp.dot(h_scr[...], w_ref[...], preferred_element_type=jnp.float32)
    # Message passing (MXU): [NP, NP] @ [NP, FP]; norm already folded into A_hat.
    s = jnp.dot(a_ref[...], t, preferred_element_type=jnp.float32)
    out = s + b_ref[...]

    @pl.when(layer < n_layers - 1)      # hidden layers: ReLU, carry to next layer
    def _():
        h_scr[...] = jnp.maximum(out, 0.0)

    @pl.when(layer == n_layers - 1)     # last layer: no activation, emit output
    def _():
        o_ref[...] = out


def gcn_model_forward(a, norm, features, params):
    """Fused forward pass of GCN_model (eval semantics).

    a        : [N, N]   dense adjacency (A[i, j] = 1 if edge j -> i)
    norm     : [N, 1]   per-node deg^{-1/2}
    features : [N, F_in]
    params   : list of (W [f_in, f_out], b [1, f_out]) per GCN layer
    """
    # TODO(synk): training-mode dropout (nn.Dropout) not applied; eval semantics.
    n = a.shape[0]
    f_in = features.shape[1]
    n_layers = len(params)
    f_out_last = params[-1][0].shape[1]

    # Fold the symmetric normalization into the adjacency once (algebraically
    # identical to applying *norm before and after the aggregation each layer).
    a_hat = (norm * a) * norm.reshape(1, -1)

    # Lane-dense padding: feature dims and node dim up to multiples of 128.
    feat_dims = [f_in] + [w.shape[1] for (w, _) in params]
    FP = _round_up(max(feat_dims), 128)
    NP = _round_up(n, 128)

    a_pad = jnp.zeros((NP, NP), jnp.float32).at[:n, :n].set(a_hat)
    h_pad = jnp.zeros((NP, FP), jnp.float32).at[:n, :f_in].set(features)

    w_stack = jnp.zeros((n_layers, FP, FP), jnp.float32)
    b_stack = jnp.zeros((n_layers, 1, FP), jnp.float32)
    for li, (w, b) in enumerate(params):
        fi, fo = w.shape
        w_stack = w_stack.at[li, :fi, :fo].set(w)
        b_stack = b_stack.at[li, 0, :fo].set(b.reshape(-1))

    flops = n_layers * (2 * NP * FP * FP + 2 * NP * NP * FP)
    bytes_accessed = 4 * (a_pad.size + h_pad.size + w_stack.size +
                          b_stack.size + NP * FP)

    out_pad = pl.pallas_call(
        _fused_gcn_kernel,
        out_shape=jax.ShapeDtypeStruct((NP, FP), jnp.float32),
        grid_spec=pltpu.PrefetchScalarGridSpec(
            num_scalar_prefetch=0,
            grid=(n_layers,),
            in_specs=[
                pl.BlockSpec((NP, NP), lambda l: (0, 0)),            # A_hat (resident)
                pl.BlockSpec((NP, FP), lambda l: (0, 0)),            # h0    (resident)
                pl.BlockSpec((None, FP, FP), lambda l: (l, 0, 0)),   # W_l   (pipelined)
                pl.BlockSpec((None, 1, FP), lambda l: (l, 0, 0)),    # b_l   (pipelined)
            ],
            out_specs=pl.BlockSpec((NP, FP), lambda l: (0, 0)),      # resident output
            scratch_shapes=[pltpu.VMEM((NP, FP), jnp.float32)],      # layer-to-layer h
        ),
        compiler_params=pltpu.CompilerParams(
            dimension_semantics=("arbitrary",),   # layers are sequentially dependent
        ),
        cost_estimate=pl.CostEstimate(
            flops=flops, transcendentals=0, bytes_accessed=bytes_accessed),
    )(a_pad, h_pad, w_stack, b_stack)

    return out_pad[:n, :f_out_last]


def init_gcn_params(key, in_feats, n_hidden, n_classes, n_layers):
    """Matches GCN_model.__init__: layer dims and uniform(-stdv, stdv) init."""
    dims = [(in_feats, n_hidden)]
    for _ in range(n_layers - 1):
        dims.append((n_hidden, n_hidden))
    dims.append((n_hidden, n_classes))

    params = []
    for (fi, fo) in dims:
        key, kw, kb = jax.random.split(key, 3)
        stdv = 1.0 / math.sqrt(fo)
        w = jax.random.uniform(kw, (fi, fo), jnp.float32, -stdv, stdv)
        b = jax.random.uniform(kb, (1, fo), jnp.float32, -stdv, stdv)
        params.append((w, b))
    return params


def gcn_model_reference(a, norm, features, params):
    """Plain-JAX reference mirroring the PyTorch module (eval mode)."""
    h = features
    for li, (w, b) in enumerate(params):
        t = (h @ w) * norm
        s = a @ t
        out = s * norm + b
        if li < len(params) - 1:
            out = jnp.maximum(out, 0.0)
        h = out
    return h


if __name__ == "__main__":
    key = jax.random.PRNGKey(0)

    # Small synthetic graph / feature sizes.
    N = 16            # nodes
    IN_FEATS = 8
    N_HIDDEN = 32
    N_CLASSES = 4
    N_LAYERS = 2      # -> 3 GCN layers total (in->hid, hid->hid, hid->classes)

    key, k_adj, k_feat, k_par = jax.random.split(key, 4)

    # Random symmetric adjacency with self-loops (DGL-style GCN graph).
    rand = jax.random.uniform(k_adj, (N, N))
    adj = (rand + rand.T > 1.2).astype(jnp.float32)
    adj = jnp.maximum(adj, jnp.eye(N, dtype=jnp.float32))    # self loops

    # Symmetric normalization: norm = deg^{-1/2}, per node.
    deg = jnp.sum(adj, axis=1, keepdims=True)                # [N, 1]
    norm = 1.0 / jnp.sqrt(jnp.maximum(deg, 1.0))             # [N, 1]

    features = jax.random.normal(k_feat, (N, IN_FEATS), jnp.float32)

    params = init_gcn_params(k_par, IN_FEATS, N_HIDDEN, N_CLASSES, N_LAYERS)

    out = gcn_model_forward(adj, norm, features, params)
    out = jax.block_until_ready(out)

    ref = gcn_model_reference(adj, norm, features, params)
    assert out.shape == (N, N_CLASSES), out.shape
    assert jnp.allclose(out, ref, atol=1e-4, rtol=1e-4), "mismatch vs reference"

    print("KERNEL_OK")
</pallas_src>

<mosaic_0001>
module attributes {stable_mosaic.version = 11 : i64} {
  func.func @_fused_gcn_kernel(%arg0: i32, %arg1: memref<128x128xf32, #tpu.memory_space<vmem>>, %arg2: memref<128x128xf32, #tpu.memory_space<vmem>>, %arg3: memref<1x128x128xf32, #tpu.memory_space<vmem>>, %arg4: memref<1x1x128xf32, #tpu.memory_space<vmem>>, %arg5: memref<128x128xf32, #tpu.memory_space<vmem>>, %arg6: memref<128x128xf32, #tpu.memory_space<vmem>>) attributes {dimension_semantics = [#tpu.dimension_semantics<arbitrary>], iteration_bounds = array<i64: 3>, scalar_prefetch = 0 : i64, scratch_operands = 1 : i64, tpu.core_type = #tpu.core_type<tc>, window_params = [{pipeline_mode = #tpu.pipeline_mode<synchronous>, transform_indices = @transform_0, window_bounds = array<i64: 128, 128>}, {pipeline_mode = #tpu.pipeline_mode<synchronous>, transform_indices = @transform_1, window_bounds = array<i64: 128, 128>}, {transform_indices = @transform_2, window_bounds = array<i64: 1, 128, 128>}, {transform_indices = @transform_3, window_bounds = array<i64: 1, 1, 128>}, {pipeline_mode = #tpu.pipeline_mode<synchronous>, transform_indices = @transform_4, window_bounds = array<i64: 128, 128>}]} {
    %c0_i32 = arith.constant 0 : i32
    %0 = arith.cmpi eq, %arg0, %c0_i32 : i32
    %1 = arith.extui %0 : i1 to i32
    %c0_i32_0 = arith.constant 0 : i32
    %2 = arith.cmpi ne, %1, %c0_i32_0 : i32
    scf.if %2 {
      %c0_14 = arith.constant 0 : index
      %c0_15 = arith.constant 0 : index
      %19 = vector.load %arg2[%c0_14, %c0_15] : memref<128x128xf32, #tpu.memory_space<vmem>>, vector<128x128xf32>
      %c0_16 = arith.constant 0 : index
      %c0_17 = arith.constant 0 : index
      %20 = vector.load %arg6[%c0_16, %c0_17] : memref<128x128xf32, #tpu.memory_space<vmem>>, vector<128x128xf32>
      tpu.vector_store %arg6[%c0_16, %c0_17], %19 {strides = array<i32>} : memref<128x128xf32, #tpu.memory_space<vmem>>, vector<128x128xf32>,
    } else {
    }
    %c0 = arith.constant 0 : index
    %c0_1 = arith.constant 0 : index
    %3 = vector.load %arg6[%c0, %c0_1] : memref<128x128xf32, #tpu.memory_space<vmem>>, vector<128x128xf32>
    %c0_2 = arith.constant 0 : index
    %c0_3 = arith.constant 0 : index
    %c0_4 = arith.constant 0 : index
    %4 = vector.load %arg3[%c0_2, %c0_3, %c0_4] : memref<1x128x128xf32, #tpu.memory_space<vmem>>, vector<1x128x128xf32>
    %5 = vector.shape_cast %4 : vector<1x128x128xf32> to vector<128x128xf32>
    %cst = arith.constant dense<0.000000e+00> : vector<128x128xf32>
    %6 = tpu.matmul %3, %5, %cst {dimension_numbers = #tpu.dot_dimension_numbers<[1], [0], [0], [1], [0, 0, 1, 1], [], []>} : vector<128x128xf32>, vector<128x128xf32>, vector<128x128xf32> -> vector<128x128xf32>
    %c0_5 = arith.constant 0 : index
    %c0_6 = arith.constant 0 : index
    %7 = vector.load %arg1[%c0_5, %c0_6] : memref<128x128xf32, #tpu.memory_space<vmem>>, vector<128x128xf32>
    %cst_7 = arith.constant dense<0.000000e+00> : vector<128x128xf32>
    %8 = tpu.matmul %7, %6, %cst_7 {dimension_numbers = #tpu.dot_dimension_numbers<[1], [0], [0], [1], [0, 0, 1, 1], [], []>} : vector<128x128xf32>, vector<128x128xf32>, vector<128x128xf32> -> vector<128x128xf32>
    %c0_8 = arith.constant 0 : index
    %c0_9 = arith.constant 0 : index
    %c0_10 = arith.constant 0 : index
    %9 = vector.load %arg4[%c0_8, %c0_9, %c0_10] : memref<1x1x128xf32, #tpu.memory_space<vmem>>, vector<1x1x128xf32>
    %10 = vector.shape_cast %9 : vector<1x1x128xf32> to vector<1x128xf32>
    %11 = vector.broadcast %10 : vector<1x128xf32> to vector<128x128xf32>
    %12 = arith.addf %8, %11 : vector<128x128xf32>
    %c2_i32 = arith.constant 2 : i32
    %13 = arith.cmpi slt, %arg0, %c2_i32 : i32
    %14 = arith.extui %13 : i1 to i32
    %c0_i32_11 = arith.constant 0 : i32
    %15 = arith.cmpi ne, %14, %c0_i32_11 : i32
    scf.if %15 {
      %cst_14 = arith.constant 0.000000e+00 : f32
      %19 = vector.broadcast %cst_14 : f32 to vector<128x128xf32>
      %20 = arith.maximumf %12, %19 : vector<128x128xf32>
      %c0_15 = arith.constant 0 : index
      %c0_16 = arith.constant 0 : index
      %21 = vector.load %arg6[%c0_15, %c0_16] : memref<128x128xf32, #tpu.memory_space<vmem>>, vector<128x128xf32>
      tpu.vector_store %arg6[%c0_15, %c0_16], %20 {strides = array<i32>} : memref<128x128xf32, #tpu.memory_space<vmem>>, vector<128x128xf32>,
    } else {
    }
    %c2_i32_12 = arith.constant 2 : i32
    %16 = arith.cmpi eq, %arg0, %c2_i32_12 : i32
    %17 = arith.extui %16 : i1 to i32
    %c0_i32_13 = arith.constant 0 : i32
    %18 = arith.cmpi ne, %17, %c0_i32_13 : i32
    scf.if %18 {
      %c0_14 = arith.constant 0 : index
      %c0_15 = arith.constant 0 : index
      %19 = vector.load %arg5[%c0_14, %c0_15] : memref<128x128xf32, #tpu.memory_space<vmem>>, vector<128x128xf32>
      tpu.vector_store %arg5[%c0_14, %c0_15], %12 {strides = array<i32>} : memref<128x128xf32, #tpu.memory_space<vmem>>, vector<128x128xf32>,
    } else {
    }
    return
  }
  func.func @transform_0(%arg0: i32) -> (i32, i32) {
    %c0_i32 = arith.constant 0 : i32
    %c0_i32_0 = arith.constant 0 : i32
    %c0_i32_1 = arith.constant 0 : i32
    return %c0_i32, %c0_i32_0 : i32, i32
  }
  func.func @transform_1(%arg0: i32) -> (i32, i32) {
    %c0_i32 = arith.constant 0 : i32
    %c0_i32_0 = arith.constant 0 : i32
    %c0_i32_1 = arith.constant 0 : i32
    return %c0_i32, %c0_i32_0 : i32, i32
  }
  func.func @transform_2(%arg0: i32) -> (i32, i32, i32) {
    %c0_i32 = arith.constant 0 : i32
    %c0_i32_0 = arith.constant 0 : i32
    %c0_i32_1 = arith.constant 0 : i32
    return %arg0, %c0_i32, %c0_i32_0 : i32, i32, i32
  }
  func.func @transform_3(%arg0: i32) -> (i32, i32, i32) {
    %c0_i32 = arith.constant 0 : i32
    %c0_i32_0 = arith.constant 0 : i32
    %c0_i32_1 = arith.constant 0 : i32
    return %arg0, %c0_i32, %c0_i32_0 : i32, i32, i32
  }
  func.func @transform_4(%arg0: i32) -> (i32, i32) {
    %c0_i32 = arith.constant 0 : i32
    %c0_i32_0 = arith.constant 0 : i32
    %c0_i32_1 = arith.constant 0 : i32
    return %c0_i32, %c0_i32_0 : i32, i32
  }
}

</mosaic_0001>

<llo_original>
// kernel: tpu_custom_call.1
$region0: #{tpu_custom_call.1}
  #allocation0 [shape = 'u32[]', space=smem, size = 0x4, offset = 0x4, fixed_abs, tag = 'smem constant byte address 0x4 - core index']
  #allocation1 [shape = 'u32[72,128]{1,0:T(1,128)}', space=vmem, size = 0x9000, scoped, tag = 'internal scratch']
  #allocation2 [shape = 'f32[128,128]{1,0:T(8,128)}', space=vmem, size = 0x10000, scoped, tag = 'scratch operand']
  %s0 = inlined_call_operand.hbm [shape: f32[128,128], index: 0, kind: input, shape index: {}]
  %s1 = inlined_call_operand.hbm [shape: f32[128,128], index: 1, kind: input, shape index: {}]
  %s2 = inlined_call_operand.hbm [shape: f32[3,128,128], index: 2, kind: input, shape index: {}]
  %s3 = inlined_call_operand.hbm [shape: f32[3,1,128], index: 3, kind: input, shape index: {}]
  %s4 = inlined_call_operand.hbm [shape: f32[128,128], index: 4, kind: output, shape index: {}]
  %s5 = sld [smem:[#allocation0]]
  $region77: #{tpu_custom_call.1} parent=0
    _
  %s7 = ssub.s32 1, %s5
  %s8 = scalar_select 0, %s7, %s5
  $region1: #{tpu_custom_call.1} parent=0
    #allocation3 [shape = 'u8[65536]{0}', space=vmem, size = 0x10000, scoped, tag = 'input window, operand 0, single buffered']
    #allocation4 [shape = 's32[2]{0}', space=sflag, size = 0x8, scoped, tag = 'scoped memory for tpu_custom_call.1']
    #allocation5 [shape = 's32[2]{0}', space=sflag, size = 0x8, scoped, tag = 'scoped memory for tpu_custom_call.1']
    #allocation6 [shape = 'u8[65536]{0}', space=vmem, size = 0x10000, scoped, tag = 'input window, operand 1, single buffered']
    #allocation7 [shape = 's32[1]{0}', space=sflag, size = 0x4, scoped, tag = 'scoped memory for tpu_custom_call.1']
    #allocation8 [shape = 'u8[131072]{0}', space=vmem, size = 0x20000, scoped, tag = 'input window, operand 2']
    #allocation9 [shape = 'u8[1024]{0}', space=vmem, size = 0x400, scoped, tag = 'input window, operand 3']
    #allocation10 [shape = 'u8[65536]{0}', space=vmem, size = 0x10000, scoped, tag = 'output window, operand 0, single buffered']
    %9 = vsyncpa [#allocation4], 0
    %10 = vsyncpa [#allocation7], 0
    %11 = vsyncpa [#allocation5], 0
    loop: start=0, step=1, limit=5
    $region2: #{tpu_custom_call.1} parent=1 // loop_pre_header
      _
    $region3: #{tpu_custom_call.1} parent=1 // loop_header
      %s13 = sphi 0, %s17
      %p14 = scmp.ge.s32.totalorder %s13, 5
      %s21 = sphi 0, %s21
      %s23 = sphi 0, %s21
      %s24 = sphi 0, %s23
      %s38 = sphi 0, %s24
      %s42 = sphi 0, %s42
      %s44 = sphi 0, %s42
      %s45 = sphi 0, %s44
      %s59 = sphi 0, %s45
      %s65 = sphi 0, %s67
      %s68 = sphi 0, %s65
      %s69 = sphi 0, %s68
      %s85 = sphi 0, %s69
      %s91 = sphi 0, %s93
      %s94 = sphi 0, %s91
      %s95 = sphi 0, %s94
      %s111 = sphi 0, %s95
      %s115 = sphi 0, %s115
      %s117 = sphi 0, %s115
      %s118 = sphi 0, %s117
      %s132 = sphi 0, %s118
    $region4: #{tpu_custom_call.1} parent=1 // loop_header_branch
      %16 = sbr.rel (%p14) target = $region8
    $region5: #{tpu_custom_call.1} parent=1 // loop_body
      %s18 = ssub.s32 %s13, 1
      %s19 = ssub.s32 %s13, 2
      %s20 = sadd.s32 %s13, 1
      %s22 = sadd.s32 %s21, 1
      %p25 = scmp.eq.s32.totalorder %s13, 2
      %p26 = scmp.ne.s32.totalorder %s21, %s23
      %p27 = scmp.eq.s32.totalorder %s13, 0
      %p28 = por %p26, %p27
      %p29 = scmp.ne.s32.totalorder %s21, %s23
      %p30 = scmp.eq.s32.totalorder %s18, 2
      %p31 = por %p29, %p30
      %p32 = scmp.ne.s32.totalorder %s23, %s24
      %p33 = scmp.eq.s32.totalorder %s18, 0
      %p34 = por %p32, %p33
      %p35 = scmp.ne.s32.totalorder %s23, %s24
      %p36 = scmp.eq.s32.totalorder %s19, 2
      %p37 = por %p35, %p36
      %p39 = scmp.ne.s32.totalorder %s24, %s38
      %p40 = scmp.eq.s32.totalorder %s19, 0
      %p41 = por %p39, %p40
      %s43 = sadd.s32 %s42, 1
      %p46 = scmp.eq.s32.totalorder %s13, 2
      %p47 = scmp.ne.s32.totalorder %s42, %s44
      %p48 = scmp.eq.s32.totalorder %s13, 0
      %p49 = por %p47, %p48
      %p50 = scmp.ne.s32.totalorder %s42, %s44
      %p51 = scmp.eq.s32.totalorder %s18, 2
      %p52 = por %p50, %p51
      %p53 = scmp.ne.s32.totalorder %s44, %s45
      %p54 = scmp.eq.s32.totalorder %s18, 0
      %p55 = por %p53, %p54
      %p56 = scmp.ne.s32.totalorder %s44, %s45
      %p57 = scmp.eq.s32.totalorder %s19, 2
      %p58 = por %p56, %p57
      %p60 = scmp.ne.s32.totalorder %s45, %s59
      %p61 = scmp.eq.s32.totalorder %s19, 0
      %p62 = por %p60, %p61
      %s63 = ssub.s32 %s13, %s20
      %p64 = scmp.eq.s32.totalorder %s63, 0
      %s66 = sadd.s32 %s65, 1
      %s67 = scalar_select %p64, %s65, %s66
      %p70 = pneg %p64
      %p71 = scmp.eq.s32.totalorder %s13, 2
      %p72 = por %p70, %p71
      %p73 = scmp.ne.s32.totalorder %s65, %s68
      %p74 = scmp.eq.s32.totalorder %s13, 0
      %p75 = por %p73, %p74
      %p76 = scmp.ne.s32.totalorder %s65, %s68
      %p77 = scmp.eq.s32.totalorder %s18, 2
      %p78 = por %p76, %p77
      %p79 = scmp.ne.s32.totalorder %s68, %s69
      %p80 = scmp.eq.s32.totalorder %s18, 0
      %p81 = por %p79, %p80
      %p82 = scmp.ne.s32.totalorder %s68, %s69
      %p83 = scmp.eq.s32.totalorder %s19, 2
      %p84 = por %p82, %p83
      %p86 = scmp.ne.s32.totalorder %s69, %s85
      %p87 = scmp.eq.s32.totalorder %s19, 0
      %p88 = por %p86, %p87
      %s89 = ssub.s32 %s13, %s20
      %p90 = scmp.eq.s32.totalorder %s89, 0
      %s92 = sadd.s32 %s91, 1
      %s93 = scalar_select %p90, %s91, %s92
      %p96 = pneg %p90
      %p97 = scmp.eq.s32.totalorder %s13, 2
      %p98 = por %p96, %p97
      %p99 = scmp.ne.s32.totalorder %s91, %s94
      %p100 = scmp.eq.s32.totalorder %s13, 0
      %p101 = por %p99, %p100
      %p102 = scmp.ne.s32.totalorder %s91, %s94
      %p103 = scmp.eq.s32.totalorder %s18, 2
      %p104 = por %p102, %p103
      %p105 = scmp.ne.s32.totalorder %s94, %s95
      %p106 = scmp.eq.s32.totalorder %s18, 0
      %p107 = por %p105, %p106
      %p108 = scmp.ne.s32.totalorder %s94, %s95
      %p109 = scmp.eq.s32.totalorder %s19, 2
      %p110 = por %p108, %p109
      %p112 = scmp.ne.s32.totalorder %s95, %s111
      %p113 = scmp.eq.s32.totalorder %s19, 0
      %p114 = por %p112, %p113
      %s116 = sadd.s32 %s115, 1
      %p119 = scmp.eq.s32.totalorder %s13, 2
      %p120 = scmp.ne.s32.totalorder %s115, %s117
      %p121 = scmp.eq.s32.totalorder %s13, 0
      %p122 = por %p120, %p121
      %p123 = scmp.ne.s32.totalorder %s115, %s117
      %p124 = scmp.eq.s32.totalorder %s18, 2
      %p125 = por %p123, %p124
      %p126 = scmp.ne.s32.totalorder %s117, %s118
      %p127 = scmp.eq.s32.totalorder %s18, 0
      %p128 = por %p126, %p127
      %p129 = scmp.ne.s32.totalorder %s117, %s118
      %p130 = scmp.eq.s32.totalorder %s19, 2
      %p131 = por %p129, %p130
      %p133 = scmp.ne.s32.totalorder %s118, %s132
      %p134 = scmp.eq.s32.totalorder %s19, 0
      %p135 = por %p133, %p134
      %p136 = scmp.le.s32.totalorder 1, %s13
      %p137 = scmp.lt.s32.totalorder %s13, 4
      %p138 = pnand %p136, %p137
      %p139 = pneg %p138
      // Predicated region
      $region9: #{tpu_custom_call.1} parent=5 // pred_check
        _
      $region10: #{tpu_custom_call.1} parent=5 // pred_check_branch
        %141 = sbr.rel (%p138) target = $region12
      $region11: #{tpu_custom_call.1} parent=5 // pred_region
        %s142 = ssub.s32 %s13, 1
        // Predicated region
        $region13: #{tpu_custom_call.1} parent=11 // pred_check
          %p143 = pneg %p34
        $region14: #{tpu_custom_call.1} parent=11 // pred_check_branch
          %145 = sbr.rel (%p143) target = $region16
        $region15: #{tpu_custom_call.1} parent=11 // pred_region
          %147 = vsyncadd [#allocation4], 0
          %s148 = sshll.u32 %s0, 4
          %s149 = int_to_ptr.hbm [resolvable:$true] %s148
          %s150 = sshll.u32 [#allocation3], 4
          %s151 = int_to_ptr.vmem [resolvable:$true] %s150
          %156 = dma.hbm_to_vmem [thread:$0]  %s149, 2048, %s151, [#allocation4], 128, 128, 8
        $region16: #{tpu_custom_call.1} parent=11 // pred_fallthru
          _
        // Predicated region
        $region17: #{tpu_custom_call.1} parent=11 // pred_check
          %p157 = pneg %p55
        $region18: #{tpu_custom_call.1} parent=11 // pred_check_branch
          %159 = sbr.rel (%p157) target = $region20
        $region19: #{tpu_custom_call.1} parent=11 // pred_region
          %161 = vsyncadd [#allocation7], 0
          %s162 = sshll.u32 %s1, 4
          %s163 = int_to_ptr.hbm [resolvable:$true] %s162
          %s164 = sshll.u32 [#allocation6], 4
          %s165 = int_to_ptr.vmem [resolvable:$true] %s164
          %170 = dma.hbm_to_vmem [thread:$0]  %s163, 2048, %s165, [#allocation7], 128, 128, 8
        $region20: #{tpu_custom_call.1} parent=11 // pred_fallthru
          _
      $region12: #{tpu_custom_call.1} parent=5 // pred_fallthru
        _
      %p171 = scmp.lt.s32.totalorder %s13, 3
      // Predicated region
      $region21: #{tpu_custom_call.1} parent=5 // pred_check
        %p172 = pneg %p171
      $region22: #{tpu_custom_call.1} parent=5 // pred_check_branch
        %174 = sbr.rel (%p172) target = $region24
      $region23: #{tpu_custom_call.1} parent=5 // pred_region
        // Predicated region
        $region25: #{tpu_custom_call.1} parent=23 // pred_check
          %p175 = pneg %p75
        $region26: #{tpu_custom_call.1} parent=23 // pred_check_branch
          %177 = sbr.rel (%p175) target = $region28
        $region27: #{tpu_custom_call.1} parent=23 // pred_region
          %s178 = sand.u32 %s13, 1
          %s179 = scalar_lea.sflag [#allocation4], %s178
          %s180 = sand.u32 %s65, 1
          %s181 = smul.addr %s180, 128
          %s182 = scalar_lea.vmem [#allocation8], %s181
          %184 = vsyncadd %s179, 0
          %s185 = smul.addr %s13, 16
          %s186 = smul.addr %s185, 8
          %s187 = scalar_lea.hbm %s2, %s186
          %s188 = sshll.u32 %s187, 4
          %s189 = int_to_ptr.hbm [resolvable:$true] %s188
          %s190 = sshll.u32 %s182, 4
          %s191 = int_to_ptr.vmem [resolvable:$true] %s190
          %196 = dma.hbm_to_vmem [thread:$0]  %s189, 2048, %s191, %s179, 128, 128, 8
        $region28: #{tpu_custom_call.1} parent=23 // pred_fallthru
          _
        // Predicated region
        $region29: #{tpu_custom_call.1} parent=23 // pred_check
          %p197 = pneg %p101
        $region30: #{tpu_custom_call.1} parent=23 // pred_check_branch
          %199 = sbr.rel (%p197) target = $region32
        $region31: #{tpu_custom_call.1} parent=23 // pred_region
          %s200 = sand.u32 %s13, 1
          %s201 = scalar_lea.sflag [#allocation4], %s200
          %s202 = sand.u32 %s91, 1
          %s203 = scalar_lea.vmem [#allocation9], %s202
          %205 = vsyncadd %s201, 0
          %s206 = scalar_lea.hbm %s3, %s13
          %s208 = sshll.u32 %s206, 4
          %s209 = int_to_ptr.hbm [resolvable:$true] %s208
          %s210 = sshll.u32 %s203, 4
          %s211 = int_to_ptr.vmem [resolvable:$true] %s210
          %213 = dma.hbm_to_vmem [thread:$0]  %s209, 16, %s211, %s201
        $region32: #{tpu_custom_call.1} parent=23 // pred_fallthru
          _
      $region24: #{tpu_custom_call.1} parent=5 // pred_fallthru
        _
      %p214 = scmp.le.s32.totalorder 1, %s13
      %p215 = scmp.lt.s32.totalorder %s13, 4
      %p216 = pnand %p214, %p215
      %p217 = pneg %p216
      // Predicated region
      $region33: #{tpu_custom_call.1} parent=5 // pred_check
        _
      $region34: #{tpu_custom_call.1} parent=5 // pred_check_branch
        %219 = sbr.rel (%p216) target = $region36
      $region35: #{tpu_custom_call.1} parent=5 // pred_region
        %s220 = ssub.s32 %s13, 1
        // Predicated region
        $region37: #{tpu_custom_call.1} parent=35 // pred_check
          %p221 = pneg %p34
        $region38: #{tpu_custom_call.1} parent=35 // pred_check_branch
          %223 = sbr.rel (%p221) target = $region40
        $region39: #{tpu_custom_call.1} parent=35 // pred_region
          %225 = dma.done [#allocation4], 2048
        $region40: #{tpu_custom_call.1} parent=35 // pred_fallthru
          _
        // Predicated region
        $region41: #{tpu_custom_call.1} parent=35 // pred_check
          %p226 = pneg %p55
        $region42: #{tpu_custom_call.1} parent=35 // pred_check_branch
          %228 = sbr.rel (%p226) target = $region44
        $region43: #{tpu_custom_call.1} parent=35 // pred_region
          %230 = dma.done [#allocation7], 2048
        $region44: #{tpu_custom_call.1} parent=35 // pred_fallthru
          _
        %s231 = sand.u32 %s18, 1
        %s232 = scalar_lea.sflag [#allocation4], %s231
        %s233 = sand.u32 %s68, 1
        %s234 = smul.addr %s233, 128
        %s235 = scalar_lea.vmem [#allocation8], %s234
        // Predicated region
        $region45: #{tpu_custom_call.1} parent=35 // pred_check
          %p236 = pneg %p81
        $region46: #{tpu_custom_call.1} parent=35 // pred_check_branch
          %238 = sbr.rel (%p236) target = $region48
        $region47: #{tpu_custom_call.1} parent=35 // pred_region
          %240 = dma.done %s232, 2048
        $region48: #{tpu_custom_call.1} parent=35 // pred_fallthru
          _
        %s241 = sand.u32 %s18, 1
        %s242 = scalar_lea.sflag [#allocation4], %s241
        %s243 = sand.u32 %s94, 1
        %s244 = scalar_lea.vmem [#allocation9], %s243
        // Predicated region
        $region49: #{tpu_custom_call.1} parent=35 // pred_check
          %p245 = pneg %p107
        $region50: #{tpu_custom_call.1} parent=35 // pred_check_branch
          %247 = sbr.rel (%p245) target = $region52
        $region51: #{tpu_custom_call.1} parent=35 // pred_region
          %249 = dma.done %s242, 16
        $region52: #{tpu_custom_call.1} parent=35 // pred_fallthru
          _
        %p250 = pneg %p34
        %p251 = pneg %p31
        %p252 = pneg %p55
        %p253 = pneg %p52
        %s254 = sand.u32 %s18, 1
        %s255 = scalar_lea.sflag [#allocation4], %s254
        %s256 = sand.u32 %s68, 1
        %s257 = smul.addr %s256, 128
        %s258 = scalar_lea.vmem [#allocation8], %s257
        %p259 = pneg %p81
        %p260 = pneg %p78
        %s261 = sand.u32 %s18, 1
        %s262 = scalar_lea.sflag [#allocation4], %s261
        %s263 = sand.u32 %s94, 1
        %s264 = scalar_lea.vmem [#allocation9], %s263
        %p265 = pneg %p107
        %p266 = pneg %p104
        %p267 = pneg %p128
        %p268 = pneg %p125
        %p269 = scmp.eq.s32.totalorder %s18, 0
        // Predicated region
        $region53: #{tpu_custom_call.1} parent=35 // pred_check
          %p270 = pneg %p269
        $region54: #{tpu_custom_call.1} parent=35 // pred_check_branch
          %272 = sbr.rel (%p270) target = $region56
        $region55: #{tpu_custom_call.1} parent=35 // pred_region
          %v273 = vld [vmem:[#allocation6] sm:$0xff]
          %v274 = vld [vmem:[#allocation6 + $0x8] sm:$0xff]
          %v275 = vld [vmem:[#allocation6 + $0x10] sm:$0xff]
          %v276 = vld [vmem:[#allocation6 + $0x18] sm:$0xff]
          %v277 = vld [vmem:[#allocation6 + $0x20] sm:$0xff]
          %v278 = vld [vmem:[#allocation6 + $0x28] sm:$0xff]
          %v279 = vld [vmem:[#allocation6 + $0x30] sm:$0xff]
          %v280 = vld [vmem:[#allocation6 + $0x38] sm:$0xff]
          %v281 = vld [vmem:[#allocation6 + $0x40] sm:$0xff]
          %v282 = vld [vmem:[#allocation6 + $0x48] sm:$0xff]
          %v283 = vld [vmem:[#allocation6 + $0x50] sm:$0xff]
          %v284 = vld [vmem:[#allocation6 + $0x58] sm:$0xff]
          %v285 = vld [vmem:[#allocation6 + $0x60] sm:$0xff]
          %v286 = vld [vmem:[#allocation6 + $0x68] sm:$0xff]
          %v287 = vld [vmem:[#allocation6 + $0x70] sm:$0xff]
          %v288 = vld [vmem:[#allocation6 + $0x78] sm:$0xff]
          %289 = vst [vmem:[#allocation2] sm:$0xff] %v273
          %290 = vst [vmem:[#allocation2 + $0x8] sm:$0xff] %v274
          %291 = vst [vmem:[#allocation2 + $0x10] sm:$0xff] %v275
          %292 = vst [vmem:[#allocation2 + $0x18] sm:$0xff] %v276
          %293 = vst [vmem:[#allocation2 + $0x20] sm:$0xff] %v277
          %294 = vst [vmem:[#allocation2 + $0x28] sm:$0xff] %v278
          %295 = vst [vmem:[#allocation2 + $0x30] sm:$0xff] %v279
          %296 = vst [vmem:[#allocation2 + $0x38] sm:$0xff] %v280
          %297 = vst [vmem:[#allocation2 + $0x40] sm:$0xff] %v281
          %298 = vst [vmem:[#allocation2 + $0x48] sm:$0xff] %v282
          %299 = vst [vmem:[#allocation2 + $0x50] sm:$0xff] %v283
          %300 = vst [vmem:[#allocation2 + $0x58] sm:$0xff] %v284
          %301 = vst [vmem:[#allocation2 + $0x60] sm:$0xff] %v285
          %302 = vst [vmem:[#allocation2 + $0x68] sm:$0xff] %v286
          %303 = vst [vmem:[#allocation2 + $0x70] sm:$0xff] %v287
          %304 = vst [vmem:[#allocation2 + $0x78] sm:$0xff] %v288
        $region56: #{tpu_custom_call.1} parent=35 // pred_fallthru
          _
        %v305 = vld [vmem:[#allocation2] sm:$0xff]
        %v306 = vld [vmem:[#allocation2 + $0x8] sm:$0xff]
        %v307 = vld [vmem:[#allocation2 + $0x10] sm:$0xff]
        %v308 = vld [vmem:[#allocation2 + $0x18] sm:$0xff]
        %v309 = vld [vmem:[#allocation2 + $0x20] sm:$0xff]
        %v310 = vld [vmem:[#allocation2 + $0x28] sm:$0xff]
        %v311 = vld [vmem:[#allocation2 + $0x30] sm:$0xff]
        %v312 = vld [vmem:[#allocation2 + $0x38] sm:$0xff]
        %v313 = vld [vmem:[#allocation2 + $0x40] sm:$0xff]
        %v314 = vld [vmem:[#allocation2 + $0x48] sm:$0xff]
        %v315 = vld [vmem:[#allocation2 + $0x50] sm:$0xff]
        %v316 = vld [vmem:[#allocation2 + $0x58] sm:$0xff]
        %v317 = vld [vmem:[#allocation2 + $0x60] sm:$0xff]
        %v318 = vld [vmem:[#allocation2 + $0x68] sm:$0xff]
        %v319 = vld [vmem:[#allocation2 + $0x70] sm:$0xff]
        %v320 = vld [vmem:[#allocation2 + $0x78] sm:$0xff]
        %v321 = vld [vmem:[%s235] sm:$0xff]
        %v322 = vld [vmem:[%s235 + $0x8] sm:$0xff]
        %v323 = vld [vmem:[%s235 + $0x10] sm:$0xff]
        %v324 = vld [vmem:[%s235 + $0x18] sm:$0xff]
        %v325 = vld [vmem:[%s235 + $0x20] sm:$0xff]
        %v326 = vld [vmem:[%s235 + $0x28] sm:$0xff]
        %v327 = vld [vmem:[%s235 + $0x30] sm:$0xff]
        %v328 = vld [vmem:[%s235 + $0x38] sm:$0xff]
        %v329 = vld [vmem:[%s235 + $0x40] sm:$0xff]
        %v330 = vld [vmem:[%s235 + $0x48] sm:$0xff]
        %v331 = vld [vmem:[%s235 + $0x50] sm:$0xff]
        %v332 = vld [vmem:[%s235 + $0x58] sm:$0xff]
        %v333 = vld [vmem:[%s235 + $0x60] sm:$0xff]
        %v334 = vld [vmem:[%s235 + $0x68] sm:$0xff]
        %v335 = vld [vmem:[%s235 + $0x70] sm:$0xff]
        %v336 = vld [vmem:[%s235 + $0x78] sm:$0xff]
        %337 = vmatpush.msra.mxu0 %v336
        %338 = vmatpush.msra.mxu0 %v335
        %339 = vmatpush.msra.mxu0 %v334
        %340 = vmatpush.msra.mxu0 %v333
        %341 = vmatpush.msra.mxu0 %v332
        %342 = vmatpush.msra.mxu0 %v331
        %343 = vmatpush.msra.mxu0 %v330
        %344 = vmatpush.msra.mxu0 %v329
        %345 = vmatpush.msra.mxu0 %v328
        %346 = vmatpush.msra.mxu0 %v327
        %347 = vmatpush.msra.mxu0 %v326
        %348 = vmatpush.msra.mxu0 %v325
        %349 = vmatpush.msra.mxu0 %v324
        %350 = vmatpush.msra.mxu0 %v323
        %351 = vmatpush.msra.mxu0 %v322
        %352 = vmatpush.msra.mxu0 %v321
        %353 = vmatmul.f32.gmra.mxu0 %v305
        %v354 = vpop.f32.mrf.mxu0
        %v355 = vadd.f32 0.0, %v354
        %356 = vmatmul.f32.gmra.mxu0 %v306
        %v357 = vpop.f32.mrf.mxu0
        %v358 = vadd.f32 0.0, %v357
        %359 = vmatmul.f32.gmra.mxu0 %v307
        %v360 = vpop.f32.mrf.mxu0
        %v361 = vadd.f32 0.0, %v360
        %362 = vmatmul.f32.gmra.mxu0 %v308
        %v363 = vpop.f32.mrf.mxu0
        %v364 = vadd.f32 0.0, %v363
        %365 = vmatmul.f32.gmra.mxu0 %v309
        %v366 = vpop.f32.mrf.mxu0
        %v367 = vadd.f32 0.0, %v366
        %368 = vmatmul.f32.gmra.mxu0 %v310
        %v369 = vpop.f32.mrf.mxu0
        %v370 = vadd.f32 0.0, %v369
        %371 = vmatmul.f32.gmra.mxu0 %v311
        %v372 = vpop.f32.mrf.mxu0
        %v373 = vadd.f32 0.0, %v372
        %374 = vmatmul.f32.gmra.mxu0 %v312
        %v375 = vpop.f32.mrf.mxu0
        %v376 = vadd.f32 0.0, %v375
        %377 = vmatmul.f32.gmra.mxu0 %v313
        %v378 = vpop.f32.mrf.mxu0
        %v379 = vadd.f32 0.0, %v378
        %380 = vmatmul.f32.gmra.mxu0 %v314
        %v381 = vpop.f32.mrf.mxu0
        %v382 = vadd.f32 0.0, %v381
        %383 = vmatmul.f32.gmra.mxu0 %v315
        %v384 = vpop.f32.mrf.mxu0
        %v385 = vadd.f32 0.0, %v384
        %386 = vmatmul.f32.gmra.mxu0 %v316
        %v387 = vpop.f32.mrf.mxu0
        %v388 = vadd.f32 0.0, %v387
        %389 = vmatmul.f32.gmra.mxu0 %v317
        %v390 = vpop.f32.mrf.mxu0
        %v391 = vadd.f32 0.0, %v390
        %392 = vmatmul.f32.gmra.mxu0 %v318
        %v393 = vpop.f32.mrf.mxu0
        %v394 = vadd.f32 0.0, %v393
        %395 = vmatmul.f32.gmra.mxu0 %v319
        %v396 = vpop.f32.mrf.mxu0
        %v397 = vadd.f32 0.0, %v396
        %398 = vmatmul.f32.gmra.mxu0 %v320
        %v399 = vpop.f32.mrf.mxu0
        %v400 = vadd.f32 0.0, %v399
        %401 = vdwg.mxu0
        %v402 = vld [vmem:[#allocation3] sm:$0xff]
        %v403 = vld [vmem:[#allocation3 + $0x8] sm:$0xff]
        %v404 = vld [vmem:[#allocation3 + $0x10] sm:$0xff]
        %v405 = vld [vmem:[#allocation3 + $0x18] sm:$0xff]
        %v406 = vld [vmem:[#allocation3 + $0x20] sm:$0xff]
        %v407 = vld [vmem:[#allocation3 + $0x28] sm:$0xff]
        %v408 = vld [vmem:[#allocation3 + $0x30] sm:$0xff]
        %v409 = vld [vmem:[#allocation3 + $0x38] sm:$0xff]
        %v410 = vld [vmem:[#allocation3 + $0x40] sm:$0xff]
        %v411 = vld [vmem:[#allocation3 + $0x48] sm:$0xff]
        %v412 = vld [vmem:[#allocation3 + $0x50] sm:$0xff]
        %v413 = vld [vmem:[#allocation3 + $0x58] sm:$0xff]
        %v414 = vld [vmem:[#allocation3 + $0x60] sm:$0xff]
        %v415 = vld [vmem:[#allocation3 + $0x68] sm:$0xff]
        %v416 = vld [vmem:[#allocation3 + $0x70] sm:$0xff]
        %v417 = vld [vmem:[#allocation3 + $0x78] sm:$0xff]
        %v418 = vld [vmem:[%s244] sm:$0x1]
        %v420 = vperm.slane %v418, 0
        %422 = vmatpush.msra.mxu0 %v400
        %423 = vmatpush.msra.mxu0 %v397
        %424 = vmatpush.msra.mxu0 %v394
        %425 = vmatpush.msra.mxu0 %v391
        %426 = vmatpush.msra.mxu0 %v388
        %427 = vmatpush.msra.mxu0 %v385
        %428 = vmatpush.msra.mxu0 %v382
        %429 = vmatpush.msra.mxu0 %v379
        %430 = vmatpush.msra.mxu0 %v376
        %431 = vmatpush.msra.mxu0 %v373
        %432 = vmatpush.msra.mxu0 %v370
        %433 = vmatpush.msra.mxu0 %v367
        %434 = vmatpush.msra.mxu0 %v364
        %435 = vmatpush.msra.mxu0 %v361
        %436 = vmatpush.msra.mxu0 %v358
        %437 = vmatpush.msra.mxu0 %v355
        %438 = vmatmul.f32.gmra.mxu0 %v402
        %v439 = vpop.f32.mrf.mxu0
        %v440 = vadd.f32 %v420, %v439
        %441 = vmatmul.f32.gmra.mxu0 %v403
        %v442 = vpop.f32.mrf.mxu0
        %v443 = vadd.f32 %v420, %v442
        %444 = vmatmul.f32.gmra.mxu0 %v404
        %v445 = vpop.f32.mrf.mxu0
        %v446 = vadd.f32 %v420, %v445
        %447 = vmatmul.f32.gmra.mxu0 %v405
        %v448 = vpop.f32.mrf.mxu0
        %v449 = vadd.f32 %v420, %v448
        %450 = vmatmul.f32.gmra.mxu0 %v406
        %v451 = vpop.f32.mrf.mxu0
        %v452 = vadd.f32 %v420, %v451
        %453 = vmatmul.f32.gmra.mxu0 %v407
        %v454 = vpop.f32.mrf.mxu0
        %v455 = vadd.f32 %v420, %v454
        %456 = vmatmul.f32.gmra.mxu0 %v408
        %v457 = vpop.f32.mrf.mxu0
        %v458 = vadd.f32 %v420, %v457
        %459 = vmatmul.f32.gmra.mxu0 %v409
        %v460 = vpop.f32.mrf.mxu0
        %v461 = vadd.f32 %v420, %v460
        %462 = vmatmul.f32.gmra.mxu0 %v410
        %v463 = vpop.f32.mrf.mxu0
        %v464 = vadd.f32 %v420, %v463
        %465 = vmatmul.f32.gmra.mxu0 %v411
        %v466 = vpop.f32.mrf.mxu0
        %v467 = vadd.f32 %v420, %v466
        %468 = vmatmul.f32.gmra.mxu0 %v412
        %v469 = vpop.f32.mrf.mxu0
        %v470 = vadd.f32 %v420, %v469
        %471 = vmatmul.f32.gmra.mxu0 %v413
        %v472 = vpop.f32.mrf.mxu0
        %v473 = vadd.f32 %v420, %v472
        %474 = vmatmul.f32.gmra.mxu0 %v414
        %v475 = vpop.f32.mrf.mxu0
        %v476 = vadd.f32 %v420, %v475
        %477 = vmatmul.f32.gmra.mxu0 %v415
        %v478 = vpop.f32.mrf.mxu0
        %v479 = vadd.f32 %v420, %v478
        %480 = vmatmul.f32.gmra.mxu0 %v416
        %v481 = vpop.f32.mrf.mxu0
        %v482 = vadd.f32 %v420, %v481
        %483 = vmatmul.f32.gmra.mxu0 %v417
        %v484 = vpop.f32.mrf.mxu0
        %v485 = vadd.f32 %v420, %v484
        %486 = vdwg.mxu0
        %p487 = scmp.lt.s32.totalorder %s18, 2
        // Predicated region
        $region57: #{tpu_custom_call.1} parent=35 // pred_check
          %p488 = pneg %p487
        $region58: #{tpu_custom_call.1} parent=35 // pred_check_branch
          %490 = sbr.rel (%p488) target = $region60
        $region59: #{tpu_custom_call.1} parent=35 // pred_region
          %v491 = vmax.f32 %v440, 0.0
          %v492 = vmax.f32 %v443, 0.0
          %v493 = vmax.f32 %v446, 0.0
          %v494 = vmax.f32 %v449, 0.0
          %v495 = vmax.f32 %v452, 0.0
          %v496 = vmax.f32 %v455, 0.0
          %v497 = vmax.f32 %v458, 0.0
          %v498 = vmax.f32 %v461, 0.0
          %v499 = vmax.f32 %v464, 0.0
          %v500 = vmax.f32 %v467, 0.0
          %v501 = vmax.f32 %v470, 0.0
          %v502 = vmax.f32 %v473, 0.0
          %v503 = vmax.f32 %v476, 0.0
          %v504 = vmax.f32 %v479, 0.0
          %v505 = vmax.f32 %v482, 0.0
          %v506 = vmax.f32 %v485, 0.0
          %507 = vst [vmem:[#allocation2] sm:$0xff] %v491
          %508 = vst [vmem:[#allocation2 + $0x8] sm:$0xff] %v492
          %509 = vst [vmem:[#allocation2 + $0x10] sm:$0xff] %v493
          %510 = vst [vmem:[#allocation2 + $0x18] sm:$0xff] %v494
          %511 = vst [vmem:[#allocation2 + $0x20] sm:$0xff] %v495
          %512 = vst [vmem:[#allocation2 + $0x28] sm:$0xff] %v496
          %513 = vst [vmem:[#allocation2 + $0x30] sm:$0xff] %v497
          %514 = vst [vmem:[#allocation2 + $0x38] sm:$0xff] %v498
          %515 = vst [vmem:[#allocation2 + $0x40] sm:$0xff] %v499
          %516 = vst [vmem:[#allocation2 + $0x48] sm:$0xff] %v500
          %517 = vst [vmem:[#allocation2 + $0x50] sm:$0xff] %v501
          %518 = vst [vmem:[#allocation2 + $0x58] sm:$0xff] %v502
          %519 = vst [vmem:[#allocation2 + $0x60] sm:$0xff] %v503
          %520 = vst [vmem:[#allocation2 + $0x68] sm:$0xff] %v504
          %521 = vst [vmem:[#allocation2 + $0x70] sm:$0xff] %v505
          %522 = vst [vmem:[#allocation2 + $0x78] sm:$0xff] %v506
        $region60: #{tpu_custom_call.1} parent=35 // pred_fallthru
          _
        %p523 = scmp.eq.s32.totalorder %s18, 2
        // Predicated region
        $region61: #{tpu_custom_call.1} parent=35 // pred_check
          %p524 = pneg %p523
        $region62: #{tpu_custom_call.1} parent=35 // pred_check_branch
          %526 = sbr.rel (%p524) target = $region64
        $region63: #{tpu_custom_call.1} parent=35 // pred_region
          %527 = vst [vmem:[#allocation10] sm:$0xff] %v440
          %528 = vst [vmem:[#allocation10 + $0x8] sm:$0xff] %v443
          %529 = vst [vmem:[#allocation10 + $0x10] sm:$0xff] %v446
          %530 = vst [vmem:[#allocation10 + $0x18] sm:$0xff] %v449
          %531 = vst [vmem:[#allocation10 + $0x20] sm:$0xff] %v452
          %532 = vst [vmem:[#allocation10 + $0x28] sm:$0xff] %v455
          %533 = vst [vmem:[#allocation10 + $0x30] sm:$0xff] %v458
          %534 = vst [vmem:[#allocation10 + $0x38] sm:$0xff] %v461
          %535 = vst [vmem:[#allocation10 + $0x40] sm:$0xff] %v464
          %536 = vst [vmem:[#allocation10 + $0x48] sm:$0xff] %v467
          %537 = vst [vmem:[#allocation10 + $0x50] sm:$0xff] %v470
          %538 = vst [vmem:[#allocation10 + $0x58] sm:$0xff] %v473
          %539 = vst [vmem:[#allocation10 + $0x60] sm:$0xff] %v476
          %540 = vst [vmem:[#allocation10 + $0x68] sm:$0xff] %v479
          %541 = vst [vmem:[#allocation10 + $0x70] sm:$0xff] %v482
          %542 = vst [vmem:[#allocation10 + $0x78] sm:$0xff] %v485
        $region64: #{tpu_custom_call.1} parent=35 // pred_fallthru
          _
        // Predicated region
        $region65: #{tpu_custom_call.1} parent=35 // pred_check
          %p543 = pneg %p125
        $region66: #{tpu_custom_call.1} parent=35 // pred_check_branch
          %545 = sbr.rel (%p543) target = $region68
        $region67: #{tpu_custom_call.1} parent=35 // pred_region
          %547 = vsyncadd [#allocation5], 0
          %s548 = sshll.u32 [#allocation10], 4
          %s549 = int_to_ptr.vmem [resolvable:$true] %s548
          %s550 = sshll.u32 %s4, 4
          %s551 = int_to_ptr.hbm [resolvable:$true] %s550
          %556 = dma.vmem_to_hbm [thread:$0]  %s549, 2048, %s551, [#allocation5], 128, 128, 8
        $region68: #{tpu_custom_call.1} parent=35 // pred_fallthru
          _
        // Predicated region
        $region69: #{tpu_custom_call.1} parent=35 // pred_check
          %p557 = pneg %p125
        $region70: #{tpu_custom_call.1} parent=35 // pred_check_branch
          %559 = sbr.rel (%p557) target = $region72
        $region71: #{tpu_custom_call.1} parent=35 // pred_region
          %561 = dma.done [#allocation5], 2048
        $region72: #{tpu_custom_call.1} parent=35 // pred_fallthru
          _
      $region36: #{tpu_custom_call.1} parent=5 // pred_fallthru
        _
      %p562 = scmp.le.s32.totalorder 2, %s13
      // Predicated region
      $region73: #{tpu_custom_call.1} parent=5 // pred_check
        %p563 = pneg %p562
      $region74: #{tpu_custom_call.1} parent=5 // pred_check_branch
        %565 = sbr.rel (%p563) target = $region76
      $region75: #{tpu_custom_call.1} parent=5 // pred_region
        %s566 = ssub.s32 %s13, 2
      $region76: #{tpu_custom_call.1} parent=5 // pred_fallthru
        _
    $region6: #{tpu_custom_call.1} parent=1 // loop_footer
      %s17 = sadd.s32 1, %s13
    $region7: #{tpu_custom_call.1} parent=1 // loop_footer_branch
      %12 = sbr.rel target = $region3
    $region8: #{tpu_custom_call.1} parent=1 // loop_exit
      _
    %567 = vsyncpa [#allocation4], 1
    %s568 = scalar_lea.sflag [#allocation4], 1
    %569 = vsyncpa %s568, 1
    %570 = vsyncpa [#allocation7], 1
    %571 = vsyncpa [#allocation5], 1
    %s572 = scalar_lea.sflag [#allocation5], 1
    %573 = vsyncpa %s572, 1

</llo_original>
